<compile_context>
chip_gen: v6e
topology: v6e:2x2x1
jax: 0.10.0
libtpu: 0.0.40
codegen_flags: <defaults>
</compile_context>

<pallas_src>
import functools
import math

import jax
import jax.numpy as jnp
from jax.experimental import pallas as pl
from jax.experimental.pallas import tpu as pltpu


def _round_up(x, m):
    return (x + m - 1) // m * m


def _vmem_limit_bytes(need_bytes):
    """Scoped-VMEM budget: block-set size plus generous headroom, capped at v7x's
    64 MiB physical ceiling (v5e/v6e have 128 MiB physical, so the cap is safe there)."""
    return int(min(64 << 20, max(int(need_bytes * 1.5) + (2 << 20), 16 << 20)))


# ---------------------------------------------------------------------------
# Generic tiled matmul + bias (used for x@Wx+b and h@Wout+bout)
# ---------------------------------------------------------------------------
def _matmul_bias_kernel_noacc(a_ref, b_ref, bias_ref, o_ref):
    # Full-K block: single MXU pass, bias added to the f32 accumulator, no scratch.
    o_ref[...] = (jnp.dot(a_ref[...], b_ref[...], preferred_element_type=jnp.float32)
                  + bias_ref[...]).astype(o_ref.dtype)


def _matmul_bias_kernel_acc(a_ref, b_ref, bias_ref, o_ref, acc_ref):
    @pl.when(pl.program_id(2) == 0)
    def _():
        acc_ref[...] = jnp.zeros_like(acc_ref)

    acc_ref[...] += jnp.dot(a_ref[...], b_ref[...], preferred_element_type=jnp.float32)

    @pl.when(pl.program_id(2) == pl.num_programs(2) - 1)
    def _():
        o_ref[...] = (acc_ref[...] + bias_ref[...]).astype(o_ref.dtype)


def pallas_matmul_bias(a, b, bias, *, out_dtype=jnp.float32, tm=512, tn=512, tk=None):
    """out = a @ b + bias.  a: (M,K), b: (K,N) in bf16/f32, bias: (1,N) f32, f32 accumulation."""
    M, K = a.shape
    K2, N = b.shape
    assert K == K2 and bias.shape == (1, N)

    tm = min(tm, _round_up(M, 8))
    tn = min(tn, _round_up(N, 128))
    k_full = _round_up(K, 128)
    tk = k_full if tk is None else min(tk, k_full)     # default: full K, no accumulator loop
    Mp, Kp, Np = _round_up(M, tm), _round_up(K, tk), _round_up(N, tn)

    if (Mp, Kp) != (M, K):
        a = jnp.pad(a, ((0, Mp - M), (0, Kp - K)))
    if (Kp, Np) != (K, N):
        b = jnp.pad(b, ((0, Kp - K), (0, Np - N)))
    if Np != N:
        bias = jnp.pad(bias, ((0, 0), (0, Np - N)))

    n_m, n_n, n_k = Mp // tm, Np // tn, Kp // tk
    a_by, b_by = a.dtype.itemsize, b.dtype.itemsize
    o_by = jnp.dtype(out_dtype).itemsize
    need = (2 * tm * tk * a_by + 2 * tk * tn * b_by + 2 * tn * 4
            + 2 * tm * tn * o_by + (tm * tn * 4 if n_k > 1 else 0))
    cost = pl.CostEstimate(
        flops=2 * Mp * Np * Kp,
        transcendentals=0,
        bytes_accessed=(a_by * Mp * Kp * n_n + b_by * Kp * Np * n_m
                        + 4 * Np * n_m + o_by * Mp * Np),
    )

    if n_k == 1:
        out = pl.pallas_call(
            _matmul_bias_kernel_noacc,
            out_shape=jax.ShapeDtypeStruct((Mp, Np), out_dtype),
            grid_spec=pltpu.PrefetchScalarGridSpec(
                num_scalar_prefetch=0,
                grid=(n_m, n_n),
                in_specs=[
                    pl.BlockSpec((tm, tk), lambda i, j: (i, 0)),
                    pl.BlockSpec((tk, tn), lambda i, j: (0, j)),
                    pl.BlockSpec((1, tn), lambda i, j: (0, j)),
                ],
                out_specs=pl.BlockSpec((tm, tn), lambda i, j: (i, j)),
            ),
            compiler_params=pltpu.CompilerParams(
                dimension_semantics=("parallel", "parallel"),
                vmem_limit_bytes=_vmem_limit_bytes(need),
            ),
            cost_estimate=cost,
        )(a, b, bias)
    else:
        out = pl.pallas_call(
            _matmul_bias_kernel_acc,
            out_shape=jax.ShapeDtypeStruct((Mp, Np), out_dtype),
            grid_spec=pltpu.PrefetchScalarGridSpec(
                num_scalar_prefetch=0,
                grid=(n_m, n_n, n_k),
                in_specs=[
                    pl.BlockSpec((tm, tk), lambda i, j, k: (i, k)),
                    pl.BlockSpec((tk, tn), lambda i, j, k: (k, j)),
                    pl.BlockSpec((1, tn), lambda i, j, k: (0, j)),
                ],
                out_specs=pl.BlockSpec((tm, tn), lambda i, j, k: (i, j)),
                scratch_shapes=[pltpu.VMEM((tm, tn), jnp.float32)],
            ),
            compiler_params=pltpu.CompilerParams(
                dimension_semantics=("parallel", "parallel", "arbitrary"),
                vmem_limit_bytes=_vmem_limit_bytes(need),
            ),
            cost_estimate=cost,
        )(a, b, bias)
    return out[:M, :N]


# ---------------------------------------------------------------------------
# Sequential LSTM recurrence kernel (only h @ Wh + gate math on the serial path)
# ---------------------------------------------------------------------------
def _lstm_recurrence_kernel(zx_ref, wh_ref, h_ref, h_scr, c_scr, *, time_block, hidden):
    """Grid = (batch blocks, time blocks); one step processes `time_block` time steps.

    zx_ref : (TB, B_t, 4H)  precomputed x@Wx + b (gate order g,i,f,o), bf16 or f32
    wh_ref : (H, 4H)        hidden->gates weights (constant block, single-buffered)
    h_ref  : (TB, B_t, H)   output hidden states
    h_scr  : (B_t, H) f32   hidden carry across time blocks (reset at t-block 0)
    c_scr  : (B_t, H) f32   cell   carry across time blocks
    """
    H = hidden

    @pl.when(pl.program_id(1) == 0)
    def _():
        h_scr[...] = jnp.zeros_like(h_scr)
        c_scr[...] = jnp.zeros_like(c_scr)

    wh = wh_ref[...]

    # TODO(synk): at production H, consider weight-stationary MXU driving
    # (pltpu.matmul_push_rhs/acc_lhs/pop) to amortize the constant-Wh push over the
    # unrolled time steps, and per-128-lane gate chunking if vld/vst slots saturate.
    def step(s, carry):
        h_prev, c_prev = carry                                   # f32 carries
        z = (zx_ref[s].astype(jnp.float32)
             + jnp.dot(h_prev.astype(wh.dtype), wh,
                       preferred_element_type=jnp.float32))
        g = jnp.tanh(z[:, 0 * H:1 * H])
        i = jax.nn.sigmoid(z[:, 1 * H:2 * H])
        f = jax.nn.sigmoid(z[:, 2 * H:3 * H])
        o = jax.nn.sigmoid(z[:, 3 * H:4 * H])
        c_next = f * c_prev + i * g
        h_next = o * jnp.tanh(c_next)
        h_ref[s] = h_next.astype(h_ref.dtype)
        return (h_next, c_next)

    h_last, c_last = jax.lax.fori_loop(
        0, time_block, step, (h_scr[...], c_scr[...]), unroll=True)
    h_scr[...] = h_last
    c_scr[...] = c_last


def _run_lstm_recurrence(zx, wh, *, time_block, out_dtype, single_buffer_wh):
    T_p, B_p, four_H = zx.shape
    H_p = four_H // 4
    TB = time_block

    # Batch-parallel axis: lets v7x's two TensorCores split the recurrence; harmless on
    # 1-TC chips. Only split when the tile stays (16,128)-aligned for bf16.
    n_b = 2 if B_p % 32 == 0 else 1
    B_tile = B_p // n_b

    wh_kwargs = {}
    if single_buffer_wh:
        # Constant index_map -> second buffer is pure waste (halves Wh's VMEM footprint).
        wh_kwargs["pipeline_mode"] = pl.Buffered(1)
    wh_spec = pl.BlockSpec((H_p, 4 * H_p), lambda bb, tt: (0, 0), **wh_kwargs)

    zx_by, wh_by = zx.dtype.itemsize, wh.dtype.itemsize
    o_by = jnp.dtype(out_dtype).itemsize
    need = (2 * TB * B_tile * 4 * H_p * zx_by
            + (1 if single_buffer_wh else 2) * H_p * 4 * H_p * wh_by
            + 2 * TB * B_tile * H_p * o_by
            + 2 * B_tile * H_p * 4)

    return pl.pallas_call(
        functools.partial(_lstm_recurrence_kernel, time_block=TB, hidden=H_p),
        out_shape=jax.ShapeDtypeStruct((T_p, B_p, H_p), out_dtype),
        grid_spec=pltpu.PrefetchScalarGridSpec(
            num_scalar_prefetch=0,
            grid=(n_b, T_p // TB),
            in_specs=[
                pl.BlockSpec((TB, B_tile, 4 * H_p), lambda bb, tt: (tt, bb, 0)),  # zx
                wh_spec,                                                          # Wh
            ],
            out_specs=pl.BlockSpec((TB, B_tile, H_p), lambda bb, tt: (tt, bb, 0)),
            scratch_shapes=[
                pltpu.VMEM((B_tile, H_p), jnp.float32),   # h carry
                pltpu.VMEM((B_tile, H_p), jnp.float32),   # c carry
            ],
        ),
        compiler_params=pltpu.CompilerParams(
            dimension_semantics=("parallel", "arbitrary"),   # time is sequential
            vmem_limit_bytes=_vmem_limit_bytes(need),
        ),
        cost_estimate=pl.CostEstimate(
            flops=2 * T_p * B_p * H_p * 4 * H_p,
            transcendentals=5 * T_p * B_p * H_p,
            bytes_accessed=(zx_by * T_p * B_p * 4 * H_p
                            + wh_by * H_p * 4 * H_p * n_b
                            + o_by * T_p * B_p * H_p),
        ),
    )(zx, wh)


# ---------------------------------------------------------------------------
# Gate-axis padding helper: pad each of the 4 gate blocks (g,i,f,o) from H to H_pad
# so that in-kernel slices z[:, k*H_pad:(k+1)*H_pad] stay lane-aligned.
# ---------------------------------------------------------------------------
def _pad_gate_cols(w, H, H_pad):
    if H_pad == H:
        return w
    lead = w.shape[:-1]
    w4 = w.reshape(lead + (4, H))
    w4 = jnp.pad(w4, [(0, 0)] * len(lead) + [(0, 0), (0, H_pad - H)])
    return w4.reshape(lead + (4 * H_pad,))


# ---------------------------------------------------------------------------
# Forward pass
# ---------------------------------------------------------------------------
def text_generation_forward(tokens, params, *, time_block=16,
                            compute_dtype=jnp.bfloat16):
    """Forward pass of TextGenerationModel.  tokens: int32 [T, B] -> logits f32 [T, B, V]."""
    emb_table = params["embedding"]        # (V, E)
    Wx = params["Wx"]                      # (E, 4H)
    Wh = params["Wh"]                      # (H, 4H)
    b = params["b"]                        # (1, 4H)
    Wout = params["Wout"]                  # (H, V)
    bout = params["bout"]                  # (1, V)

    T, B = tokens.shape
    V, E = emb_table.shape
    H = Wh.shape[0]
    cdt = jnp.dtype(compute_dtype)

    # Hardware granules: sublane=8, lane=128.
    B_p = _round_up(B, 8)
    E_p = _round_up(E, 128)
    H_p = _round_up(H, 128)
    V_p = _round_up(V, 128)
    TB = min(time_block, T)
    T_p = _round_up(T, TB)

    # Weights: pad once, cast to compute dtype (bf16 production path). Biases stay f32
    # and are added to the f32 accumulator inside the kernels.
    Wx_p = _pad_gate_cols(jnp.pad(Wx, ((0, E_p - E), (0, 0))), H, H_p).astype(cdt)
    Wh_p = _pad_gate_cols(jnp.pad(Wh, ((0, H_p - H), (0, 0))), H, H_p).astype(cdt)
    b_p = _pad_gate_cols(b, H, H_p).astype(jnp.float32)
    Wout_p = jnp.pad(Wout, ((0, H_p - H), (0, V_p - V))).astype(cdt)
    bout_p = jnp.pad(bout, ((0, 0), (0, V_p - V))).astype(jnp.float32)

    # 1) Embedding gather: pad token ids (with id 0) and the table's E axis instead of
    # padding the gathered tensor -> no extra T*B*E HBM round trip. Padded batch rows
    # and trailing time steps do throwaway work that cannot affect kept outputs.
    emb_table_p = jnp.pad(emb_table, ((0, 0), (0, E_p - E))).astype(cdt)
    tokens_p = jnp.pad(tokens, ((0, T_p - T), (0, B_p - B)))
    embeds_p = jnp.take(emb_table_p, tokens_p, axis=0)          # (T_p, B_p, E_p)

    # 2) Time-independent gate pre-activations: one big parallel matmul, bf16 output.
    zx = pallas_matmul_bias(embeds_p.reshape(T_p * B_p, E_p), Wx_p, b_p, out_dtype=cdt)
    zx = zx.reshape(T_p, B_p, 4 * H_p)

    # 3) Sequential recurrence (Wh single-buffered when supported).
    try:
        h_seq = _run_lstm_recurrence(zx, Wh_p, time_block=TB, out_dtype=cdt,
                                     single_buffer_wh=True)
    except Exception:   # pl.Buffered(1) not supported on this JAX -> double-buffer Wh.
        h_seq = _run_lstm_recurrence(zx, Wh_p, time_block=TB, out_dtype=cdt,
                                     single_buffer_wh=False)

    # 4) Vocab projection: parallel matmul with full-K tiles and large row tiles
    # (fewer Wout re-reads). Final logits in f32.
    logits = pallas_matmul_bias(h_seq.reshape(T_p * B_p, H_p), Wout_p, bout_p,
                                out_dtype=jnp.float32)
    logits = logits.reshape(T_p, B_p, V_p)
    return logits[:T, :B, :V]


# ---------------------------------------------------------------------------
# Parameter init mirroring the PyTorch module
# ---------------------------------------------------------------------------
def init_params(key, vocabulary_size, embedding_size, lstm_hidden_dim):
    V, E, H = vocabulary_size, embedding_size, lstm_hidden_dim
    keys = jax.random.split(key, 8)
    bound = 1.0 / math.sqrt(H)

    # LSTM weights: each W_* is [H, H+E] in PyTorch, applied as concat([x, h]) @ W.T.
    def w(k):
        return jax.random.uniform(k, (H, E + H), jnp.float32, -bound, bound)

    W_g, W_i, W_f, W_o = w(keys[0]), w(keys[1]), w(keys[2]), w(keys[3])
    W_all_T = jnp.concatenate([W_g.T, W_i.T, W_f.T, W_o.T], axis=1)   # (E+H, 4H)
    Wx = W_all_T[:E, :]                    # (E, 4H)
    Wh = W_all_T[E:, :]                    # (H, 4H)

    # Biases: b_g = b_i = b_o = 0 ; b_f = 1.0 (per init_parameters).
    b = jnp.concatenate([jnp.zeros((H,)), jnp.zeros((H,)),
                         jnp.ones((H,)), jnp.zeros((H,))]).astype(jnp.float32)[None, :]

    # Embedding: nn.Embedding default init ~ N(0, 1).
    embedding = jax.random.normal(keys[4], (V, E), jnp.float32)

    # Output layer: nn.Linear default-ish uniform init.
    lb = 1.0 / math.sqrt(H)
    Wout_pt = jax.random.uniform(keys[5], (V, H), jnp.float32, -lb, lb)
    bout = jax.random.uniform(keys[6], (1, V), jnp.float32, -lb, lb)

    return {
        "embedding": embedding,
        "Wx": Wx,
        "Wh": Wh,
        "b": b,
        "Wout": Wout_pt.T,   # (H, V)
        "bout": bout,
    }


def _reference_forward(tokens, params):
    """Pure-JAX reference identical to the PyTorch semantics."""
    embeds = jnp.take(params["embedding"], tokens, axis=0)   # (T, B, E)
    T, B, E = embeds.shape
    H = params["Wh"].shape[0]

    def step(carry, x_t):
        h, c = carry
        z = x_t @ params["Wx"] + h @ params["Wh"] + params["b"]
        g = jnp.tanh(z[:, 0 * H:1 * H])
        i = jax.nn.sigmoid(z[:, 1 * H:2 * H])
        f = jax.nn.sigmoid(z[:, 2 * H:3 * H])
        o = jax.nn.sigmoid(z[:, 3 * H:4 * H])
        c = f * c + i * g
        h = o * jnp.tanh(c)
        return (h, c), h

    (_, _), h_seq = jax.lax.scan(step, (jnp.zeros((B, H)), jnp.zeros((B, H))), embeds)
    return h_seq @ params["Wout"] + params["bout"]


if __name__ == "__main__":
    # Small shapes consistent with the module's forward: x is [T, B] of token ids.
    T, B = 8, 4
    vocabulary_size, embedding_size, lstm_hidden_dim = 32, 16, 32

    key = jax.random.PRNGKey(0)
    pkey, tkey = jax.random.split(key)
    params = init_params(pkey, vocabulary_size, embedding_size, lstm_hidden_dim)
    tokens = jax.random.randint(tkey, (T, B), 0, vocabulary_size, dtype=jnp.int32)

    ref = _reference_forward(tokens, params)

    # Exact f32 debug path: validates the kernel structure / padding at tight tolerance.
    out_f32 = jax.block_until_ready(
        text_generation_forward(tokens, params, compute_dtype=jnp.float32))
    assert out_f32.shape == (T, B, vocabulary_size)
    assert jnp.allclose(out_f32, ref, atol=1e-4, rtol=1e-4), "f32 Pallas path mismatch"

    # Production bf16 path (MXU-native, f32 accumulation): looser tolerance for rounding.
    out_bf16 = jax.block_until_ready(
        text_generation_forward(tokens, params, compute_dtype=jnp.bfloat16))
    assert out_bf16.shape == (T, B, vocabulary_size)
    assert jnp.allclose(out_bf16, ref, atol=1.5e-1, rtol=1e-1), "bf16 Pallas path mismatch"

    # TODO(synk): sample() (autoregressive generation with argmax/multinomial) is not
    # implemented; only the forward pass is translated.
    print("KERNEL_OK")
</pallas_src>

<mosaic_0001>
module attributes {stable_mosaic.version = 11 : i64} {
  func.func @_matmul_bias_kernel_noacc(%arg0: i32, %arg1: i32, %arg2: memref<64x128xf32, #tpu.memory_space<vmem>>, %arg3: memref<128x512xf32, #tpu.memory_space<vmem>>, %arg4: memref<1x512xf32, #tpu.memory_space<vmem>>, %arg5: memref<64x512xf32, #tpu.memory_space<vmem>>) attributes {dimension_semantics = [#tpu.dimension_semantics<parallel>, #tpu.dimension_semantics<parallel>], iteration_bounds = array<i64: 1, 1>, scalar_prefetch = 0 : i64, scratch_operands = 0 : i64, tpu.core_type = #tpu.core_type<tc>, window_params = [{transform_indices = @transform_0, window_bounds = array<i64: 64, 128>}, {transform_indices = @transform_1, window_bounds = array<i64: 128, 512>}, {transform_indices = @transform_2, window_bounds = array<i64: 1, 512>}, {transform_indices = @transform_3, window_bounds = array<i64: 64, 512>}]} {
    %c0 = arith.constant 0 : index
    %c0_0 = arith.constant 0 : index
    %0 = vector.load %arg2[%c0, %c0_0] : memref<64x128xf32, #tpu.memory_space<vmem>>, vector<64x128xf32>
    %c0_1 = arith.constant 0 : index
    %c0_2 = arith.constant 0 : index
    %1 = vector.load %arg3[%c0_1, %c0_2] : memref<128x512xf32, #tpu.memory_space<vmem>>, vector<128x512xf32>
    %cst = arith.constant dense<0.000000e+00> : vector<64x512xf32>
    %2 = tpu.matmul %0, %1, %cst {dimension_numbers = #tpu.dot_dimension_numbers<[1], [0], [0], [1], [0, 0, 1, 1], [], []>} : vector<64x128xf32>, vector<128x512xf32>, vector<64x512xf32> -> vector<64x512xf32>
    %c0_3 = arith.constant 0 : index
    %c0_4 = arith.constant 0 : index
    %3 = vector.load %arg4[%c0_3, %c0_4] : memref<1x512xf32, #tpu.memory_space<vmem>>, vector<1x512xf32>
    %4 = vector.broadcast %3 : vector<1x512xf32> to vector<64x512xf32>
    %5 = arith.addf %2, %4 : vector<64x512xf32>
    %c0_5 = arith.constant 0 : index
    %c0_6 = arith.constant 0 : index
    %6 = vector.load %arg5[%c0_5, %c0_6] : memref<64x512xf32, #tpu.memory_space<vmem>>, vector<64x512xf32>
    tpu.vector_store %arg5[%c0_5, %c0_6], %5 {strides = array<i32>} : memref<64x512xf32, #tpu.memory_space<vmem>>, vector<64x512xf32>,
    return
  }
  func.func @transform_0(%arg0: i32, %arg1: i32) -> (i32, i32) {
    %c0_i32 = arith.constant 0 : i32
    %c0_i32_0 = arith.constant 0 : i32
    return %arg0, %c0_i32 : i32, i32
  }
  func.func @transform_1(%arg0: i32, %arg1: i32) -> (i32, i32) {
    %c0_i32 = arith.constant 0 : i32
    %c0_i32_0 = arith.constant 0 : i32
    return %c0_i32, %arg1 : i32, i32
  }
  func.func @transform_2(%arg0: i32, %arg1: i32) -> (i32, i32) {
    %c0_i32 = arith.constant 0 : i32
    %c0_i32_0 = arith.constant 0 : i32
    return %c0_i32, %arg1 : i32, i32
  }
  func.func @transform_3(%arg0: i32, %arg1: i32) -> (i32, i32) {
    %c0_i32 = arith.constant 0 : i32
    return %arg0, %arg1 : i32, i32
  }
}

</mosaic_0001>

<llo_original>
// kernel: tpu_custom_call.1
$region0: #{tpu_custom_call.1}
  #allocation0 [shape = 'u32[]', space=smem, size = 0x4, offset = 0x4, fixed_abs, tag = 'smem constant byte address 0x4 - core index']
  #allocation1 [shape = 'u32[144,128]{1,0:T(1,128)}', space=vmem, size = 0x12000, scoped, tag = 'internal scratch']
  %s0 = inlined_call_operand.hbm [shape: f32[64,128], index: 0, kind: input, shape index: {}]
  %s1 = inlined_call_operand.hbm [shape: f32[128,512], index: 1, kind: input, shape index: {}]
  %s2 = inlined_call_operand.hbm [shape: f32[1,512], index: 2, kind: input, shape index: {}]
  %s3 = inlined_call_operand.hbm [shape: f32[64,512], index: 3, kind: output, shape index: {}]
  %s4 = sld [smem:[#allocation0]]
  $region34: #{tpu_custom_call.1} parent=0
    _
  %s6 = ssub.s32 1, %s4
  %s7 = scalar_select 0, %s6, %s4
  $region1: #{tpu_custom_call.1} parent=0
    #allocation2 [shape = 'u8[32768]{0}', space=vmem, size = 0x8000, scoped, tag = 'input window, operand 0, single buffered']
    #allocation3 [shape = 's32[1]{0}', space=sflag, size = 0x4, scoped, tag = 'scoped memory for tpu_custom_call.1']
    #allocation4 [shape = 's32[1]{0}', space=sflag, size = 0x4, scoped, tag = 'scoped memory for tpu_custom_call.1']
    #allocation5 [shape = 'u8[262144]{0}', space=vmem, size = 0x40000, scoped, tag = 'input window, operand 1, single buffered']
    #allocation6 [shape = 's32[1]{0}', space=sflag, size = 0x4, scoped, tag = 'scoped memory for tpu_custom_call.1']
    #allocation7 [shape = 'u8[2048]{0}', space=vmem, size = 0x800, scoped, tag = 'input window, operand 2, single buffered']
    #allocation8 [shape = 'u8[131072]{0}', space=vmem, size = 0x20000, scoped, tag = 'output window, operand 0, single buffered']
    %8 = vsyncpa [#allocation3], 0
    %9 = vsyncpa [#allocation6], 0
    %10 = vsyncpa [#allocation4], 0
    // Predicated region
    $region2: #{tpu_custom_call.1} parent=1 // pred_check
      _
    $region3: #{tpu_custom_call.1} parent=1 // pred_check_branch
      %12 = sbr.rel (0) target = $region5
    $region4: #{tpu_custom_call.1} parent=1 // pred_region
      %s14 = ssub.s32 1024, 1024
      %15 = vsyncadd [#allocation3], %s14
      %s16 = sshll.u32 [#allocation2], 4
      %s17 = int_to_ptr.vmem [resolvable:$true] %s16
      %22 = dma.hbm_to_vmem [thread:$0]  %s0, 1024, %s17, [#allocation3], 128, 128, 8
    $region5: #{tpu_custom_call.1} parent=1 // pred_fallthru
      _
    // Predicated region
    $region6: #{tpu_custom_call.1} parent=1 // pred_check
      _
    $region7: #{tpu_custom_call.1} parent=1 // pred_check_branch
      %24 = sbr.rel (0) target = $region9
    $region8: #{tpu_custom_call.1} parent=1 // pred_region
      %s26 = ssub.s32 8192, 8192
      %27 = vsyncadd [#allocation6], %s26
      %s28 = sshll.u32 [#allocation5], 4
      %s29 = int_to_ptr.vmem [resolvable:$true] %s28
      %34 = dma.hbm_to_vmem [thread:$0]  %s1, 8192, %s29, [#allocation6], 512, 512, 32
    $region9: #{tpu_custom_call.1} parent=1 // pred_fallthru
      _
    // Predicated region
    $region10: #{tpu_custom_call.1} parent=1 // pred_check
      _
    $region11: #{tpu_custom_call.1} parent=1 // pred_check_branch
      %36 = sbr.rel (0) target = $region13
    $region12: #{tpu_custom_call.1} parent=1 // pred_region
      %s38 = ssub.s32 64, 64
      %39 = vsyncadd [#allocation6], %s38
      %s41 = sshll.u32 [#allocation7], 4
      %s42 = int_to_ptr.vmem [resolvable:$true] %s41
      %44 = dma.hbm_to_vmem [thread:$0]  %s2, 64, %s42, [#allocation6]
    $region13: #{tpu_custom_call.1} parent=1 // pred_fallthru
      _
    // Predicated region
    $region14: #{tpu_custom_call.1} parent=1 // pred_check
      _
    $region15: #{tpu_custom_call.1} parent=1 // pred_check_branch
      %46 = sbr.rel (0) target = $region17
    $region16: #{tpu_custom_call.1} parent=1 // pred_region
      %47 = dma.done [#allocation3], 1024
    $region17: #{tpu_custom_call.1} parent=1 // pred_fallthru
      _
    // Predicated region
    $region18: #{tpu_custom_call.1} parent=1 // pred_check
      _
    $region19: #{tpu_custom_call.1} parent=1 // pred_check_branch
      %49 = sbr.rel (0) target = $region21
    $region20: #{tpu_custom_call.1} parent=1 // pred_region
      %50 = dma.done [#allocation6], 8192
    $region21: #{tpu_custom_call.1} parent=1 // pred_fallthru
      _
    // Predicated region
    $region22: #{tpu_custom_call.1} parent=1 // pred_check
      _
    $region23: #{tpu_custom_call.1} parent=1 // pred_check_branch
      %52 = sbr.rel (0) target = $region25
    $region24: #{tpu_custom_call.1} parent=1 // pred_region
      %53 = dma.done [#allocation6], 64
    $region25: #{tpu_custom_call.1} parent=1 // pred_fallthru
      _
    %v54 = vld [vmem:[#allocation2] sm:$0xff]
    %v55 = vld [vmem:[#allocation2 + $0x8] sm:$0xff]
    %v56 = vld [vmem:[#allocation2 + $0x10] sm:$0xff]
    %v57 = vld [vmem:[#allocation2 + $0x18] sm:$0xff]
    %v58 = vld [vmem:[#allocation2 + $0x20] sm:$0xff]
    %v59 = vld [vmem:[#allocation2 + $0x28] sm:$0xff]
    %v60 = vld [vmem:[#allocation2 + $0x30] sm:$0xff]
    %v61 = vld [vmem:[#allocation2 + $0x38] sm:$0xff]
    %v62 = vld [vmem:[#allocation5] sm:$0xff]
    %v63 = vld [vmem:[#allocation5 + $0x8] sm:$0xff]
    %v64 = vld [vmem:[#allocation5 + $0x10] sm:$0xff]
    %v65 = vld [vmem:[#allocation5 + $0x18] sm:$0xff]
    %v66 = vld [vmem:[#allocation5 + $0x20] sm:$0xff]
    %v67 = vld [vmem:[#allocation5 + $0x28] sm:$0xff]
    %v68 = vld [vmem:[#allocation5 + $0x30] sm:$0xff]
    %v69 = vld [vmem:[#allocation5 + $0x38] sm:$0xff]
    %v70 = vld [vmem:[#allocation5 + $0x40] sm:$0xff]
    %v71 = vld [vmem:[#allocation5 + $0x48] sm:$0xff]
    %v72 = vld [vmem:[#allocation5 + $0x50] sm:$0xff]
    %v73 = vld [vmem:[#allocation5 + $0x58] sm:$0xff]
    %v74 = vld [vmem:[#allocation5 + $0x60] sm:$0xff]
    %v75 = vld [vmem:[#allocation5 + $0x68] sm:$0xff]
    %v76 = vld [vmem:[#allocation5 + $0x70] sm:$0xff]
    %v77 = vld [vmem:[#allocation5 + $0x78] sm:$0xff]
    %v78 = vld [vmem:[#allocation5 + $0x80] sm:$0xff]
    %v79 = vld [vmem:[#allocation5 + $0x88] sm:$0xff]
    %v80 = vld [vmem:[#allocation5 + $0x90] sm:$0xff]
    %v81 = vld [vmem:[#allocation5 + $0x98] sm:$0xff]
    %v82 = vld [vmem:[#allocation5 + $0xa0] sm:$0xff]
    %v83 = vld [vmem:[#allocation5 + $0xa8] sm:$0xff]
    %v84 = vld [vmem:[#allocation5 + $0xb0] sm:$0xff]
    %v85 = vld [vmem:[#allocation5 + $0xb8] sm:$0xff]
    %v86 = vld [vmem:[#allocation5 + $0xc0] sm:$0xff]
    %v87 = vld [vmem:[#allocation5 + $0xc8] sm:$0xff]
    %v88 = vld [vmem:[#allocation5 + $0xd0] sm:$0xff]
    %v89 = vld [vmem:[#allocation5 + $0xd8] sm:$0xff]
    %v90 = vld [vmem:[#allocation5 + $0xe0] sm:$0xff]
    %v91 = vld [vmem:[#allocation5 + $0xe8] sm:$0xff]
    %v92 = vld [vmem:[#allocation5 + $0xf0] sm:$0xff]
    %v93 = vld [vmem:[#allocation5 + $0xf8] sm:$0xff]
    %v94 = vld [vmem:[#allocation5 + $0x100] sm:$0xff]
    %v95 = vld [vmem:[#allocation5 + $0x108] sm:$0xff]
    %v96 = vld [vmem:[#allocation5 + $0x110] sm:$0xff]
    %v97 = vld [vmem:[#allocation5 + $0x118] sm:$0xff]
    %v98 = vld [vmem:[#allocation5 + $0x120] sm:$0xff]
    %v99 = vld [vmem:[#allocation5 + $0x128] sm:$0xff]
    %v100 = vld [vmem:[#allocation5 + $0x130] sm:$0xff]
    %v101 = vld [vmem:[#allocation5 + $0x138] sm:$0xff]
    %v102 = vld [vmem:[#allocation5 + $0x140] sm:$0xff]
    %v103 = vld [vmem:[#allocation5 + $0x148] sm:$0xff]
    %v104 = vld [vmem:[#allocation5 + $0x150] sm:$0xff]
    %v105 = vld [vmem:[#allocation5 + $0x158] sm:$0xff]
    %v106 = vld [vmem:[#allocation5 + $0x160] sm:$0xff]
    %v107 = vld [vmem:[#allocation5 + $0x168] sm:$0xff]
    %v108 = vld [vmem:[#allocation5 + $0x170] sm:$0xff]
    %v109 = vld [vmem:[#allocation5 + $0x178] sm:$0xff]
    %v110 = vld [vmem:[#allocation5 + $0x180] sm:$0xff]
    %v111 = vld [vmem:[#allocation5 + $0x188] sm:$0xff]
    %v112 = vld [vmem:[#allocation5 + $0x190] sm:$0xff]
    %v113 = vld [vmem:[#allocation5 + $0x198] sm:$0xff]
    %v114 = vld [vmem:[#allocation5 + $0x1a0] sm:$0xff]
    %v115 = vld [vmem:[#allocation5 + $0x1a8] sm:$0xff]
    %v116 = vld [vmem:[#allocation5 + $0x1b0] sm:$0xff]
    %v117 = vld [vmem:[#allocation5 + $0x1b8] sm:$0xff]
    %v118 = vld [vmem:[#allocation5 + $0x1c0] sm:$0xff]
    %v119 = vld [vmem:[#allocation5 + $0x1c8] sm:$0xff]
    %v120 = vld [vmem:[#allocation5 + $0x1d0] sm:$0xff]
    %v121 = vld [vmem:[#allocation5 + $0x1d8] sm:$0xff]
    %v122 = vld [vmem:[#allocation5 + $0x1e0] sm:$0xff]
    %v123 = vld [vmem:[#allocation5 + $0x1e8] sm:$0xff]
    %v124 = vld [vmem:[#allocation5 + $0x1f0] sm:$0xff]
    %v125 = vld [vmem:[#allocation5 + $0x1f8] sm:$0xff]
    %v126 = vld [vmem:[#allocation7] sm:$0xf]
    %v128 = vlaneseq
    %v129 = vshrl.u32 %v128, 7
    %v130 = vsub.s32 0, %v129
    %v131 = vrot.slane %v126, %v130
    %v132 = vlaneseq
    %v133 = vshrl.u32 %v132, 7
    %v134 = vsub.s32 1, %v133
    %v135 = vrot.slane %v126, %v134
    %v136 = vlaneseq
    %v137 = vshrl.u32 %v136, 7
    %v138 = vsub.s32 2, %v137
    %v139 = vrot.slane %v126, %v138
    %v140 = vlaneseq
    %v141 = vshrl.u32 %v140, 7
    %v142 = vsub.s32 3, %v141
    %v143 = vrot.slane %v126, %v142
    %148 = vmatprep.subr.mxu0 %v123
    %149 = vmatpush1.msra.mxu0 %v122
    %150 = vmatprep.subr.mxu0 %v119
    %151 = vmatpush1.msra.mxu0 %v118
    %152 = vmatprep.subr.mxu0 %v115
    %153 = vmatpush1.msra.mxu0 %v114
    %154 = vmatprep.subr.mxu0 %v111
    %155 = vmatpush1.msra.mxu0 %v110
    %156 = vmatprep.subr.mxu0 %v107
    %157 = vmatpush1.msra.mxu0 %v106
    %158 = vmatprep.subr.mxu0 %v103
    %159 = vmatpush1.msra.mxu0 %v102
    %160 = vmatprep.subr.mxu0 %v99
    %161 = vmatpush1.msra.mxu0 %v98
    %162 = vmatprep.subr.mxu0 %v95
    %163 = vmatpush1.msra.mxu0 %v94
    %164 = vmatprep.subr.mxu0 %v91
    %165 = vmatpush1.msra.mxu0 %v90
    %166 = vmatprep.subr.mxu0 %v87
    %167 = vmatpush1.msra.mxu0 %v86
    %168 = vmatprep.subr.mxu0 %v83
    %169 = vmatpush1.msra.mxu0 %v82
    %170 = vmatprep.subr.mxu0 %v79
    %171 = vmatpush1.msra.mxu0 %v78
    %172 = vmatprep.subr.mxu0 %v75
    %173 = vmatpush1.msra.mxu0 %v74
    %174 = vmatprep.subr.mxu0 %v71
    %175 = vmatpush1.msra.mxu0 %v70
    %176 = vmatprep.subr.mxu0 %v67
    %177 = vmatpush1.msra.mxu0 %v66
    %178 = vmatprep.subr.mxu0 %v63
    %179 = vmatpush1.msra.mxu0 %v62
    %180 = vmatprep.subr.mxu0 0.0
    %181 = vmatpush2.msra.mxu0 0.0
    %182 = vmatprep.subr.mxu0 0.0
    %183 = vmatpush2.msra.mxu0 0.0
    %184 = vmatprep.subr.mxu0 0.0
    %185 = vmatpush2.msra.mxu0 0.0
    %186 = vmatprep.subr.mxu0 0.0
    %187 = vmatpush2.msra.mxu0 0.0
    %188 = vmatprep.subr.mxu0 0.0
    %189 = vmatpush2.msra.mxu0 0.0
    %190 = vmatprep.subr.mxu0 0.0
    %191 = vmatpush2.msra.mxu0 0.0
    %192 = vmatprep.subr.mxu0 0.0
    %193 = vmatpush2.msra.mxu0 0.0
    %194 = vmatprep.subr.mxu0 0.0
    %195 = vmatpush2.msra.mxu0 0.0
    %196 = vmatprep.subr.mxu0 0.0
    %197 = vmatpush2.msra.mxu0 0.0
    %198 = vmatprep.subr.mxu0 0.0
    %199 = vmatpush2.msra.mxu0 0.0
    %200 = vmatprep.subr.mxu0 0.0
    %201 = vmatpush2.msra.mxu0 0.0
    %202 = vmatprep.subr.mxu0 0.0
    %203 = vmatpush2.msra.mxu0 0.0
    %204 = vmatprep.subr.mxu0 0.0
    %205 = vmatpush2.msra.mxu0 0.0
    %206 = vmatprep.subr.mxu0 0.0
    %207 = vmatpush2.msra.mxu0 0.0
    %208 = vmatprep.subr.mxu0 0.0
    %209 = vmatpush2.msra.mxu0 0.0
    %210 = vmatprep.subr.mxu0 0.0
    %211 = vmatpush2.msra.mxu0 0.0
    %212 = vmatprep.mubr.f32.mxu0 0.0
    %213 = vmatmul.mubr.f32.gmra.mxu0 %v54
    %v214 = vpop.f32.mrf.mxu0
    %v215 = vadd.f32 %v131, %v214
    %v216 = vpop.f32.mrf.mxu0
    %v217 = vadd.f32 %v135, %v216
    %218 = vmatprep.mubr.f32.mxu0 0.0
    %219 = vmatmul.mubr.f32.gmra.mxu0 %v55
    %v220 = vpop.f32.mrf.mxu0
    %v221 = vadd.f32 %v131, %v220
    %v222 = vpop.f32.mrf.mxu0
    %v223 = vadd.f32 %v135, %v222
    %224 = vmatprep.mubr.f32.mxu0 0.0
    %225 = vmatmul.mubr.f32.gmra.mxu0 %v56
    %v226 = vpop.f32.mrf.mxu0
    %v227 = vadd.f32 %v131, %v226
    %v228 = vpop.f32.mrf.mxu0
    %v229 = vadd.f32 %v135, %v228
    %230 = vmatprep.mubr.f32.mxu0 0.0
    %231 = vmatmul.mubr.f32.gmra.mxu0 %v57
    %v232 = vpop.f32.mrf.mxu0
    %v233 = vadd.f32 %v131, %v232
    %v234 = vpop.f32.mrf.mxu0
    %v235 = vadd.f32 %v135, %v234
    %236 = vmatprep.mubr.f32.mxu0 0.0
    %237 = vmatmul.mubr.f32.gmra.mxu0 %v58
    %v238 = vpop.f32.mrf.mxu0
    %v239 = vadd.f32 %v131, %v238
    %v240 = vpop.f32.mrf.mxu0
    %v241 = vadd.f32 %v135, %v240
    %242 = vmatprep.mubr.f32.mxu0 0.0
    %243 = vmatmul.mubr.f32.gmra.mxu0 %v59
    %v244 = vpop.f32.mrf.mxu0
    %v245 = vadd.f32 %v131, %v244
    %v246 = vpop.f32.mrf.mxu0
    %v247 = vadd.f32 %v135, %v246
    %248 = vmatprep.mubr.f32.mxu0 0.0
    %249 = vmatmul.mubr.f32.gmra.mxu0 %v60
    %v250 = vpop.f32.mrf.mxu0
    %v251 = vadd.f32 %v131, %v250
    %v252 = vpop.f32.mrf.mxu0
    %v253 = vadd.f32 %v135, %v252
    %254 = vmatprep.mubr.f32.mxu0 0.0
    %255 = vmatmul.mubr.f32.gmra.mxu0 %v61
    %v256 = vpop.f32.mrf.mxu0
    %v257 = vadd.f32 %v131, %v256
    %v258 = vpop.f32.mrf.mxu0
    %v259 = vadd.f32 %v135, %v258
    %260 = vdwg.mxu0
    %261 = vmatprep.subr.mxu0 %v125
    %262 = vmatpush1.msra.mxu0 %v124
    %263 = vmatprep.subr.mxu0 %v121
    %264 = vmatpush1.msra.mxu0 %v120
    %265 = vmatprep.subr.mxu0 %v117
    %266 = vmatpush1.msra.mxu0 %v116
    %267 = vmatprep.subr.mxu0 %v113
    %268 = vmatpush1.msra.mxu0 %v112
    %269 = vmatprep.subr.mxu0 %v109
    %270 = vmatpush1.msra.mxu0 %v108
    %271 = vmatprep.subr.mxu0 %v105
    %272 = vmatpush1.msra.mxu0 %v104
    %273 = vmatprep.subr.mxu0 %v101
    %274 = vmatpush1.msra.mxu0 %v100
    %275 = vmatprep.subr.mxu0 %v97
    %276 = vmatpush1.msra.mxu0 %v96
    %277 = vmatprep.subr.mxu0 %v93
    %278 = vmatpush1.msra.mxu0 %v92
    %279 = vmatprep.subr.mxu0 %v89
    %280 = vmatpush1.msra.mxu0 %v88
    %281 = vmatprep.subr.mxu0 %v85
    %282 = vmatpush1.msra.mxu0 %v84
    %283 = vmatprep.subr.mxu0 %v81
    %284 = vmatpush1.msra.mxu0 %v80
    %285 = vmatprep.subr.mxu0 %v77
    %286 = vmatpush1.msra.mxu0 %v76
    %287 = vmatprep.subr.mxu0 %v73
    %288 = vmatpush1.msra.mxu0 %v72
    %289 = vmatprep.subr.mxu0 %v69
    %290 = vmatpush1.msra.mxu0 %v68
    %291 = vmatprep.subr.mxu0 %v65
    %292 = vmatpush1.msra.mxu0 %v64
    %293 = vmatprep.subr.mxu0 0.0
    %294 = vmatpush2.msra.mxu0 0.0
    %295 = vmatprep.subr.mxu0 0.0
    %296 = vmatpush2.msra.mxu0 0.0
    %297 = vmatprep.subr.mxu0 0.0
    %298 = vmatpush2.msra.mxu0 0.0
    %299 = vmatprep.subr.mxu0 0.0
    %300 = vmatpush2.msra.mxu0 0.0
    %301 = vmatprep.subr.mxu0 0.0
    %302 = vmatpush2.msra.mxu0 0.0
    %303 = vmatprep.subr.mxu0 0.0
    %304 = vmatpush2.msra.mxu0 0.0
    %305 = vmatprep.subr.mxu0 0.0
    %306 = vmatpush2.msra.mxu0 0.0
    %307 = vmatprep.subr.mxu0 0.0
    %308 = vmatpush2.msra.mxu0 0.0
    %309 = vmatprep.subr.mxu0 0.0
    %310 = vmatpush2.msra.mxu0 0.0
    %311 = vmatprep.subr.mxu0 0.0
    %312 = vmatpush2.msra.mxu0 0.0
    %313 = vmatprep.subr.mxu0 0.0
    %314 = vmatpush2.msra.mxu0 0.0
    %315 = vmatprep.subr.mxu0 0.0
    %316 = vmatpush2.msra.mxu0 0.0
    %317 = vmatprep.subr.mxu0 0.0
    %318 = vmatpush2.msra.mxu0 0.0
    %319 = vmatprep.subr.mxu0 0.0
    %320 = vmatpush2.msra.mxu0 0.0
    %321 = vmatprep.subr.mxu0 0.0
    %322 = vmatpush2.msra.mxu0 0.0
    %323 = vmatprep.subr.mxu0 0.0
    %324 = vmatpush2.msra.mxu0 0.0
    %325 = vmatprep.mubr.f32.mxu0 0.0
    %326 = vmatmul.mubr.f32.gmra.mxu0 %v54
    %v327 = vpop.f32.mrf.mxu0
    %v328 = vadd.f32 %v139, %v327
    %v329 = vpop.f32.mrf.mxu0
    %v330 = vadd.f32 %v143, %v329
    %331 = vmatprep.mubr.f32.mxu0 0.0
    %332 = vmatmul.mubr.f32.gmra.mxu0 %v55
    %v333 = vpop.f32.mrf.mxu0
    %v334 = vadd.f32 %v139, %v333
    %v335 = vpop.f32.mrf.mxu0
    %v336 = vadd.f32 %v143, %v335
    %337 = vmatprep.mubr.f32.mxu0 0.0
    %338 = vmatmul.mubr.f32.gmra.mxu0 %v56
    %v339 = vpop.f32.mrf.mxu0
    %v340 = vadd.f32 %v139, %v339
    %v341 = vpop.f32.mrf.mxu0
    %v342 = vadd.f32 %v143, %v341
    %343 = vmatprep.mubr.f32.mxu0 0.0
    %344 = vmatmul.mubr.f32.gmra.mxu0 %v57
    %v345 = vpop.f32.mrf.mxu0
    %v346 = vadd.f32 %v139, %v345
    %v347 = vpop.f32.mrf.mxu0
    %v348 = vadd.f32 %v143, %v347
    %349 = vmatprep.mubr.f32.mxu0 0.0
    %350 = vmatmul.mubr.f32.gmra.mxu0 %v58
    %v351 = vpop.f32.mrf.mxu0
    %v352 = vadd.f32 %v139, %v351
    %v353 = vpop.f32.mrf.mxu0
    %v354 = vadd.f32 %v143, %v353
    %355 = vmatprep.mubr.f32.mxu0 0.0
    %356 = vmatmul.mubr.f32.gmra.mxu0 %v59
    %v357 = vpop.f32.mrf.mxu0
    %v358 = vadd.f32 %v139, %v357
    %v359 = vpop.f32.mrf.mxu0
    %v360 = vadd.f32 %v143, %v359
    %361 = vmatprep.mubr.f32.mxu0 0.0
    %362 = vmatmul.mubr.f32.gmra.mxu0 %v60
    %v363 = vpop.f32.mrf.mxu0
    %v364 = vadd.f32 %v139, %v363
    %v365 = vpop.f32.mrf.mxu0
    %v366 = vadd.f32 %v143, %v365
    %367 = vmatprep.mubr.f32.mxu0 0.0
    %368 = vmatmul.mubr.f32.gmra.mxu0 %v61
    %v369 = vpop.f32.mrf.mxu0
    %v370 = vadd.f32 %v139, %v369
    %v371 = vpop.f32.mrf.mxu0
    %v372 = vadd.f32 %v143, %v371
    %373 = vdwg.mxu0
    %374 = vst [vmem:[#allocation8] sm:$0xff] %v215
    %375 = vst [vmem:[#allocation8 + $0x8] sm:$0xff] %v217
    %376 = vst [vmem:[#allocation8 + $0x10] sm:$0xff] %v328
    %377 = vst [vmem:[#allocation8 + $0x18] sm:$0xff] %v330
    %378 = vst [vmem:[#allocation8 + $0x20] sm:$0xff] %v221
    %379 = vst [vmem:[#allocation8 + $0x28] sm:$0xff] %v223
    %380 = vst [vmem:[#allocation8 + $0x30] sm:$0xff] %v334
    %381 = vst [vmem:[#allocation8 + $0x38] sm:$0xff] %v336
    %382 = vst [vmem:[#allocation8 + $0x40] sm:$0xff] %v227
    %383 = vst [vmem:[#allocation8 + $0x48] sm:$0xff] %v229
    %384 = vst [vmem:[#allocation8 + $0x50] sm:$0xff] %v340
    %385 = vst [vmem:[#allocation8 + $0x58] sm:$0xff] %v342
    %386 = vst [vmem:[#allocation8 + $0x60] sm:$0xff] %v233
    %387 = vst [vmem:[#allocation8 + $0x68] sm:$0xff] %v235
    %388 = vst [vmem:[#allocation8 + $0x70] sm:$0xff] %v346
    %389 = vst [vmem:[#allocation8 + $0x78] sm:$0xff] %v348
    %390 = vst [vmem:[#allocation8 + $0x80] sm:$0xff] %v239
    %391 = vst [vmem:[#allocation8 + $0x88] sm:$0xff] %v241
    %392 = vst [vmem:[#allocation8 + $0x90] sm:$0xff] %v352
    %393 = vst [vmem:[#allocation8 + $0x98] sm:$0xff] %v354
    %394 = vst [vmem:[#allocation8 + $0xa0] sm:$0xff] %v245
    %395 = vst [vmem:[#allocation8 + $0xa8] sm:$0xff] %v247
    %396 = vst [vmem:[#allocation8 + $0xb0] sm:$0xff] %v358
    %397 = vst [vmem:[#allocation8 + $0xb8] sm:$0xff] %v360
    %398 = vst [vmem:[#allocation8 + $0xc0] sm:$0xff] %v251
    %399 = vst [vmem:[#allocation8 + $0xc8] sm:$0xff] %v253
    %400 = vst [vmem:[#allocation8 + $0xd0] sm:$0xff] %v364
    %401 = vst [vmem:[#allocation8 + $0xd8] sm:$0xff] %v366
    %402 = vst [vmem:[#allocation8 + $0xe0] sm:$0xff] %v257
    %403 = vst [vmem:[#allocation8 + $0xe8] sm:$0xff] %v259
    %404 = vst [vmem:[#allocation8 + $0xf0] sm:$0xff] %v370
    %405 = vst [vmem:[#allocation8 + $0xf8] sm:$0xff] %v372
    // Predicated region
    $region26: #{tpu_custom_call.1} parent=1 // pred_check
      _
    $region27: #{tpu_custom_call.1} parent=1 // pred_check_branch
      %407 = sbr.rel (0) target = $region29
    $region28: #{tpu_custom_call.1} parent=1 // pred_region
      %s409 = ssub.s32 4096, 4096
      %410 = vsyncadd [#allocation4], %s409
      %s411 = sshll.u32 [#allocation8], 4
      %s412 = int_to_ptr.vmem [resolvable:$true] %s411
      %417 = dma.vmem_to_hbm [thread:$0]  %s412, 4096, %s3, [#allocation4], 512, 512, 32
    $region29: #{tpu_custom_call.1} parent=1 // pred_fallthru
      _
    // Predicated region
    $region30: #{tpu_custom_call.1} parent=1 // pred_check
      _
    $region31: #{tpu_custom_call.1} parent=1 // pred_check_branch
      %419 = sbr.rel (0) target = $region33
    $region32: #{tpu_custom_call.1} parent=1 // pred_region
      %420 = dma.done [#allocation4], 4096
    $region33: #{tpu_custom_call.1} parent=1 // pred_fallthru
      _
    %421 = vsyncpa [#allocation3], 1
    %422 = vsyncpa [#allocation6], 1
    %423 = vsyncpa [#allocation4], 1

</llo_original>
